<compile_context>
chip_gen: v5e
topology: v5e:2x2
jax: 0.10.0
libtpu: 0.0.40
codegen_flags: <defaults>
</compile_context>

<pallas_src>
import functools

import jax
import jax.numpy as jnp
import numpy as np
from jax import lax
from jax.experimental import pallas as pl
from jax.experimental.pallas import tpu as pltpu


def conv_block_kernel(x_ref, wpc_ref, wdc_ref, mask_ref, out_ref, *, W):
    """One pixel-block per grid step (channel-major, lane-flat layout).

    x_ref   : (Cin_p, P)    pixels along lanes, input channels along sublanes
    wpc_ref : (Cout, Cin_p) 1x1 pointwise weight (Cin zero-padded to 8)
    wdc_ref : (Cout, 9)     depthwise 3x3 taps, t = di*3 + dj
    mask_ref: (4, P)        0/1 border-valid masks [w-1, w+1, h-1, h+1]
    out_ref : (Cout, P)
    P = (images in block) * H * W, (n, h, w) flattened along the lane axis.
    """
    # ---- pointwise 1x1 conv: one plain dense MXU matmul --------------------
    # (On v6e/v7x these inputs could be bf16 with the f32 accumulate kept;
    #  left f32 here since Cin is tiny and to hold the 1e-4 reference check.)
    planes = jnp.dot(wpc_ref[...], x_ref[...],
                     preferred_element_type=jnp.float32)         # (Cout, P)
    P = planes.shape[1]

    taps = wdc_ref[...]          # (Cout, 9), vreg-resident
    masks = mask_ref[...]        # (4, P)

    # ---- depthwise 3x3 on the register-resident planes ---------------------
    # w (dj) shifts: lane roll by +/-1, zero the w-border via the valid masks.
    col_m = pltpu.roll(planes, 1, axis=1) * masks[0:1, :]        # x[.., w-1]
    col_0 = planes                                               # x[.., w  ]
    col_p = pltpu.roll(planes, P - 1, axis=1) * masks[1:2, :]    # x[.., w+1]

    def tap(di, dj):             # (Cout, 1) column, lane-broadcast in the MAC
        t = di * 3 + dj
        return taps[:, t:t + 1]

    # Three independent MAC chains (one per row offset di) -> fills the VALU
    # slots instead of one 9-deep dependent accumulation chain.
    s_top = tap(0, 0) * col_m + tap(0, 1) * col_0 + tap(0, 2) * col_p
    s_mid = tap(1, 0) * col_m + tap(1, 1) * col_0 + tap(1, 2) * col_p
    s_bot = tap(2, 0) * col_m + tap(2, 1) * col_0 + tap(2, 2) * col_p

    # h (di) shifts: lane roll by +/-W + h-border mask (the h mask also kills
    # any wrap-around between images inside the block).
    out = (pltpu.roll(s_top, W, axis=1) * masks[2:3, :]          # x[h-1, ..]
           + s_mid
           + pltpu.roll(s_bot, P - W, axis=1) * masks[3:4, :])   # x[h+1, ..]
    out_ref[...] = out.astype(out_ref.dtype)


@functools.partial(jax.jit, static_argnames=("num_blocks",))
def convolution_block(x_nchw, w_pc, w_dc, *, num_blocks=1):
    """x_nchw: (N, Cin, H, W); w_pc: (Cout, Cin, 1, 1); w_dc: (Cout, 1, 3, 3).
    Returns (N, Cout, H, W), matching PyTorch ConvolutionBlock.forward.

    num_blocks: grid steps over the batch.  Use 1 on v5e/v6e (single
    TensorCore: no serial-grid overhead, bigger matmul); 2 on v7x so both
    TensorCores get a "parallel" block.
    """
    N, Cin, H, W = x_nchw.shape
    Cout = w_pc.shape[0]
    assert N % num_blocks == 0
    nb = N // num_blocks            # images per grid step
    P = N * H * W                   # total pixels
    Pb = nb * H * W                 # pixels per block (lane axis)
    assert num_blocks == 1 or Pb % 128 == 0, "pixel block must stay lane-aligned"

    Cin_p = -(-Cin // 8) * 8        # pad the matmul K dim to the sublane tile

    # ---- layout plumbing + weight folding -----------------------------------
    # TODO(synk): in a real model pre-fold the weights once at init and keep
    # activations channel-major (C, N*H*W) end-to-end instead of paying these
    # transposes around every call.
    x_cp = jnp.transpose(x_nchw, (1, 0, 2, 3)).reshape(Cin, P)
    x_cp = jnp.pad(x_cp, ((0, Cin_p - Cin), (0, 0)))             # (Cin_p, P)

    wpc = jnp.pad(w_pc[:, :, 0, 0].astype(jnp.float32),
                  ((0, 0), (0, Cin_p - Cin)))                    # (Cout, Cin_p)
    wdc = w_dc[:, 0, :, :].reshape(Cout, 9).astype(jnp.float32)  # (Cout, 9)

    # 0/1 border-valid masks, one per shift direction (static, trace-time).
    hh, ww = np.meshgrid(np.arange(H), np.arange(W), indexing="ij")
    mask = np.stack([
        (ww - 1 >= 0), (ww + 1 <= W - 1),       # w-1 valid, w+1 valid
        (hh - 1 >= 0), (hh + 1 <= H - 1),       # h-1 valid, h+1 valid
    ]).reshape(4, H * W).astype(np.float32)
    mask = jnp.asarray(np.tile(mask, (1, nb)))                   # (4, Pb)

    kernel = functools.partial(conv_block_kernel, W=W)
    out_cp = pl.pallas_call(
        kernel,
        out_shape=jax.ShapeDtypeStruct((Cout, P), x_nchw.dtype),
        grid_spec=pltpu.PrefetchScalarGridSpec(
            num_scalar_prefetch=0,
            grid=(num_blocks,),
            in_specs=[
                pl.BlockSpec((Cin_p, Pb), lambda i: (0, i)),
                pl.BlockSpec((Cout, Cin_p), lambda i: (0, 0)),
                pl.BlockSpec((Cout, 9), lambda i: (0, 0)),
                pl.BlockSpec((4, Pb), lambda i: (0, 0)),
            ],
            out_specs=pl.BlockSpec((Cout, Pb), lambda i: (0, i)),
        ),
        compiler_params=pltpu.CompilerParams(
            dimension_semantics=("parallel",)),
    )(x_cp, wpc, wdc, mask)
    # TODO(synk): for production H*W, also tile the pixel (lane) axis per grid
    # step (per-tile masks + 1-row halo) and set vmem_limit_bytes; at these
    # sizes the whole batch easily fits in VMEM.

    return jnp.transpose(out_cp.reshape(Cout, N, H, W), (1, 0, 2, 3))


def convolution_block_ref(x_nchw, w_pc, w_dc):
    """Pure-JAX reference (lax conv) for correctness checking."""
    Cout = w_pc.shape[0]
    o = lax.conv_general_dilated(
        x_nchw, w_pc, window_strides=(1, 1), padding="VALID",
        dimension_numbers=("NCHW", "OIHW", "NCHW"))
    return lax.conv_general_dilated(
        o, w_dc, window_strides=(1, 1), padding=((1, 1), (1, 1)),
        dimension_numbers=("NCHW", "OIHW", "NCHW"),
        feature_group_count=Cout)


if __name__ == "__main__":
    # pc_in = 4, pc_out = 8, batch = 2, spatial = 16x16
    N, Cin, Cout, H, W = 2, 4, 8, 16, 16

    key = jax.random.PRNGKey(0)
    kx, kpc, kdc = jax.random.split(key, 3)

    x = jax.random.normal(kx, (N, Cin, H, W), dtype=jnp.float32)
    w_pc = jax.random.normal(kpc, (Cout, Cin, 1, 1), dtype=jnp.float32) * (1.0 / Cin) ** 0.5
    w_dc = jax.random.normal(kdc, (Cout, 1, 3, 3), dtype=jnp.float32) * (1.0 / 9.0) ** 0.5

    ref = convolution_block_ref(x, w_pc, w_dc)

    # v5e/v6e configuration: whole batch in one grid step.
    out = jax.block_until_ready(convolution_block(x, w_pc, w_dc))
    assert out.shape == (N, Cout, H, W), out.shape
    assert jnp.allclose(out, ref, atol=1e-4, rtol=1e-4), float(
        jnp.max(jnp.abs(out - ref)))

    # v7x configuration: 2-way parallel grid over the batch (both TensorCores).
    out2 = jax.block_until_ready(convolution_block(x, w_pc, w_dc, num_blocks=2))
    assert jnp.allclose(out2, ref, atol=1e-4, rtol=1e-4), float(
        jnp.max(jnp.abs(out2 - ref)))

    print("KERNEL_OK")
</pallas_src>

<mosaic_0001>
module attributes {stable_mosaic.version = 11 : i64} {
  func.func @conv_block_kernel(%arg0: i32, %arg1: memref<8x512xf32, #tpu.memory_space<vmem>>, %arg2: memref<8x8xf32, #tpu.memory_space<vmem>>, %arg3: memref<8x9xf32, #tpu.memory_space<vmem>>, %arg4: memref<4x512xf32, #tpu.memory_space<vmem>>, %arg5: memref<8x512xf32, #tpu.memory_space<vmem>>) attributes {dimension_semantics = [#tpu.dimension_semantics<parallel>], iteration_bounds = array<i64: 1>, scalar_prefetch = 0 : i64, scratch_operands = 0 : i64, tpu.core_type = #tpu.core_type<tc>, window_params = [{transform_indices = @transform_0, window_bounds = array<i64: 8, 512>}, {pipeline_mode = #tpu.pipeline_mode<synchronous>, transform_indices = @transform_1, window_bounds = array<i64: 8, 8>}, {pipeline_mode = #tpu.pipeline_mode<synchronous>, transform_indices = @transform_2, window_bounds = array<i64: 8, 9>}, {pipeline_mode = #tpu.pipeline_mode<synchronous>, transform_indices = @transform_3, window_bounds = array<i64: 4, 512>}, {transform_indices = @transform_4, window_bounds = array<i64: 8, 512>}]} {
    %c0 = arith.constant 0 : index
    %c0_0 = arith.constant 0 : index
    %0 = vector.load %arg2[%c0, %c0_0] : memref<8x8xf32, #tpu.memory_space<vmem>>, vector<8x8xf32>
    %c0_1 = arith.constant 0 : index
    %c0_2 = arith.constant 0 : index
    %1 = vector.load %arg1[%c0_1, %c0_2] : memref<8x512xf32, #tpu.memory_space<vmem>>, vector<8x512xf32>
    %cst = arith.constant dense<0.000000e+00> : vector<8x512xf32>
    %2 = tpu.matmul %0, %1, %cst {dimension_numbers = #tpu.dot_dimension_numbers<[1], [0], [0], [1], [0, 0, 1, 1], [], []>} : vector<8x8xf32>, vector<8x512xf32>, vector<8x512xf32> -> vector<8x512xf32>
    %c0_3 = arith.constant 0 : index
    %c0_4 = arith.constant 0 : index
    %3 = vector.load %arg3[%c0_3, %c0_4] : memref<8x9xf32, #tpu.memory_space<vmem>>, vector<8x9xf32>
    %c0_5 = arith.constant 0 : index
    %c0_6 = arith.constant 0 : index
    %4 = vector.load %arg4[%c0_5, %c0_6] : memref<4x512xf32, #tpu.memory_space<vmem>>, vector<4x512xf32>
    %c1_i32 = arith.constant 1 : i32
    %5 = tpu.dynamic_rotate %2 by %c1_i32 dim 1 : vector<8x512xf32>, i32 -> vector<8x512xf32>
    %6 = vector.extract_strided_slice %4 {offsets = [0, 0], sizes = [1, 512], strides = [1, 1]} : vector<4x512xf32> to vector<1x512xf32>
    %7 = vector.broadcast %6 : vector<1x512xf32> to vector<8x512xf32>
    %8 = arith.mulf %5, %7 : vector<8x512xf32>
    %c511_i32 = arith.constant 511 : i32
    %9 = tpu.dynamic_rotate %2 by %c511_i32 dim 1 : vector<8x512xf32>, i32 -> vector<8x512xf32>
    %10 = vector.extract_strided_slice %4 {offsets = [1, 0], sizes = [1, 512], strides = [1, 1]} : vector<4x512xf32> to vector<1x512xf32>
    %11 = vector.broadcast %10 : vector<1x512xf32> to vector<8x512xf32>
    %12 = arith.mulf %9, %11 : vector<8x512xf32>
    %13 = vector.extract_strided_slice %3 {offsets = [0, 0], sizes = [8, 1], strides = [1, 1]} : vector<8x9xf32> to vector<8x1xf32>
    %14 = vector.broadcast %13 : vector<8x1xf32> to vector<8x512xf32>
    %15 = arith.mulf %14, %8 : vector<8x512xf32>
    %16 = vector.extract_strided_slice %3 {offsets = [0, 1], sizes = [8, 1], strides = [1, 1]} : vector<8x9xf32> to vector<8x1xf32>
    %17 = vector.broadcast %16 : vector<8x1xf32> to vector<8x512xf32>
    %18 = arith.mulf %17, %2 : vector<8x512xf32>
    %19 = arith.addf %15, %18 : vector<8x512xf32>
    %20 = vector.extract_strided_slice %3 {offsets = [0, 2], sizes = [8, 1], strides = [1, 1]} : vector<8x9xf32> to vector<8x1xf32>
    %21 = vector.broadcast %20 : vector<8x1xf32> to vector<8x512xf32>
    %22 = arith.mulf %21, %12 : vector<8x512xf32>
    %23 = arith.addf %19, %22 : vector<8x512xf32>
    %24 = vector.extract_strided_slice %3 {offsets = [0, 3], sizes = [8, 1], strides = [1, 1]} : vector<8x9xf32> to vector<8x1xf32>
    %25 = vector.broadcast %24 : vector<8x1xf32> to vector<8x512xf32>
    %26 = arith.mulf %25, %8 : vector<8x512xf32>
    %27 = vector.extract_strided_slice %3 {offsets = [0, 4], sizes = [8, 1], strides = [1, 1]} : vector<8x9xf32> to vector<8x1xf32>
    %28 = vector.broadcast %27 : vector<8x1xf32> to vector<8x512xf32>
    %29 = arith.mulf %28, %2 : vector<8x512xf32>
    %30 = arith.addf %26, %29 : vector<8x512xf32>
    %31 = vector.extract_strided_slice %3 {offsets = [0, 5], sizes = [8, 1], strides = [1, 1]} : vector<8x9xf32> to vector<8x1xf32>
    %32 = vector.broadcast %31 : vector<8x1xf32> to vector<8x512xf32>
    %33 = arith.mulf %32, %12 : vector<8x512xf32>
    %34 = arith.addf %30, %33 : vector<8x512xf32>
    %35 = vector.extract_strided_slice %3 {offsets = [0, 6], sizes = [8, 1], strides = [1, 1]} : vector<8x9xf32> to vector<8x1xf32>
    %36 = vector.broadcast %35 : vector<8x1xf32> to vector<8x512xf32>
    %37 = arith.mulf %36, %8 : vector<8x512xf32>
    %38 = vector.extract_strided_slice %3 {offsets = [0, 7], sizes = [8, 1], strides = [1, 1]} : vector<8x9xf32> to vector<8x1xf32>
    %39 = vector.broadcast %38 : vector<8x1xf32> to vector<8x512xf32>
    %40 = arith.mulf %39, %2 : vector<8x512xf32>
    %41 = arith.addf %37, %40 : vector<8x512xf32>
    %42 = vector.extract_strided_slice %3 {offsets = [0, 8], sizes = [8, 1], strides = [1, 1]} : vector<8x9xf32> to vector<8x1xf32>
    %43 = vector.broadcast %42 : vector<8x1xf32> to vector<8x512xf32>
    %44 = arith.mulf %43, %12 : vector<8x512xf32>
    %45 = arith.addf %41, %44 : vector<8x512xf32>
    %c16_i32 = arith.constant 16 : i32
    %46 = tpu.dynamic_rotate %23 by %c16_i32 dim 1 : vector<8x512xf32>, i32 -> vector<8x512xf32>
    %47 = vector.extract_strided_slice %4 {offsets = [2, 0], sizes = [1, 512], strides = [1, 1]} : vector<4x512xf32> to vector<1x512xf32>
    %48 = vector.broadcast %47 : vector<1x512xf32> to vector<8x512xf32>
    %49 = arith.mulf %46, %48 : vector<8x512xf32>
    %50 = arith.addf %49, %34 : vector<8x512xf32>
    %c496_i32 = arith.constant 496 : i32
    %51 = tpu.dynamic_rotate %45 by %c496_i32 dim 1 : vector<8x512xf32>, i32 -> vector<8x512xf32>
    %52 = vector.extract_strided_slice %4 {offsets = [3, 0], sizes = [1, 512], strides = [1, 1]} : vector<4x512xf32> to vector<1x512xf32>
    %53 = vector.broadcast %52 : vector<1x512xf32> to vector<8x512xf32>
    %54 = arith.mulf %51, %53 : vector<8x512xf32>
    %55 = arith.addf %50, %54 : vector<8x512xf32>
    %c0_7 = arith.constant 0 : index
    %c0_8 = arith.constant 0 : index
    %56 = vector.load %arg5[%c0_7, %c0_8] : memref<8x512xf32, #tpu.memory_space<vmem>>, vector<8x512xf32>
    tpu.vector_store %arg5[%c0_7, %c0_8], %55 {strides = array<i32>} : memref<8x512xf32, #tpu.memory_space<vmem>>, vector<8x512xf32>,
    return
  }
  func.func @transform_0(%arg0: i32) -> (i32, i32) {
    %c0_i32 = arith.constant 0 : i32
    %c0_i32_0 = arith.constant 0 : i32
    return %c0_i32, %arg0 : i32, i32
  }
  func.func @transform_1(%arg0: i32) -> (i32, i32) {
    %c0_i32 = arith.constant 0 : i32
    %c0_i32_0 = arith.constant 0 : i32
    %c0_i32_1 = arith.constant 0 : i32
    return %c0_i32, %c0_i32_0 : i32, i32
  }
  func.func @transform_2(%arg0: i32) -> (i32, i32) {
    %c0_i32 = arith.constant 0 : i32
    %c0_i32_0 = arith.constant 0 : i32
    %c0_i32_1 = arith.constant 0 : i32
    return %c0_i32, %c0_i32_0 : i32, i32
  }
  func.func @transform_3(%arg0: i32) -> (i32, i32) {
    %c0_i32 = arith.constant 0 : i32
    %c0_i32_0 = arith.constant 0 : i32
    %c0_i32_1 = arith.constant 0 : i32
    return %c0_i32, %c0_i32_0 : i32, i32
  }
  func.func @transform_4(%arg0: i32) -> (i32, i32) {
    %c0_i32 = arith.constant 0 : i32
    %c0_i32_0 = arith.constant 0 : i32
    return %c0_i32, %arg0 : i32, i32
  }
}

</mosaic_0001>

<llo_original>
// kernel: squeeze.3
$region0: #{squeeze.3}
  %s0 = inlined_call_operand.vmem [shape: f32[8,3,3], index: 0, kind: input, shape index: {}]
  %s1 = inlined_call_operand.vmem [shape: f32[8,9], index: 1, kind: output, shape index: {}]
  $region1: #{squeeze.3} parent=0
    #allocation0 [shape = 'u8[12288]{0}', space=vmem, size = 0x3000, scoped, tag = 'scoped mem for input reshape']
    %s3 = ssub.s32 16, 1
    %s4 = scalar_lea.vmem %s0, 8
    %v5 = vld [vmem:[%s4] sm:%s3]
    %s6 = scalar_lea.vmem [#allocation0], 16
    %7 = vst [vmem:[%s6] sm:%s3] %v5
    %s8 = scalar_lea.vmem %s0, 4
    %v9 = vld [vmem:[%s8] sm:%s3]
    %s10 = scalar_lea.vmem [#allocation0], 8
    %11 = vst [vmem:[%s10] sm:%s3] %v9
    %v12 = vld [vmem:[%s0] sm:%s3]
    %13 = vst [vmem:[#allocation0] sm:%s3] %v12
    %v14 = vld [vmem:[#allocation0] sm:$0x7]
    %vm15 = vcmask 64512
    %16 = vst.msk [vmem:[%s1] sm:$0x7] %vm15, %v14
    %s17 = scalar_lea.vmem [#allocation0], 8
    %v18 = vld [vmem:[%s17] sm:$0x7]
    %vm19 = vcmask 64512
    %s20 = scalar_lea.vmem %s1, 3
    %21 = vst.msk [vmem:[%s20] sm:$0x7] %vm19, %v18
    %s22 = scalar_lea.vmem [#allocation0], 16
    %v23 = vld [vmem:[%s22] sm:$0x7]
    %vm24 = vcmask 64512
    %s25 = scalar_lea.vmem %s1, 6
    %26 = vst.msk [vmem:[%s25] sm:$0x7] %vm24, %v23

// kernel: convolution_block.1
$region0: #{convolution_block.1}
  #allocation0 [shape = 'u32[]', space=smem, size = 0x4, offset = 0x4, fixed_abs, tag = 'smem constant byte address 0x4 - core index']
  #allocation1 [shape = 'u32[72,128]{1,0:T(1,128)}', space=vmem, size = 0x9000, scoped, tag = 'internal scratch']
  %s0 = inlined_call_operand.vmem [shape: f32[8,512], index: 0, kind: input, shape index: {}]
  %s1 = inlined_call_operand.vmem [shape: f32[8,8], index: 1, kind: input, shape index: {}]
  %s2 = inlined_call_operand.vmem [shape: f32[8,9], index: 2, kind: input, shape index: {}]
  %s3 = inlined_call_operand.vmem [shape: f32[4,512], index: 3, kind: input, shape index: {}]
  %s4 = inlined_call_operand.vmem [shape: f32[8,512], index: 4, kind: output, shape index: {}]
  %s5 = sld [smem:[#allocation0]]
  $region26: #{convolution_block.1} parent=0
    _
  %s7 = ssub.s32 1, %s5
  %s8 = scalar_select 0, %s7, %s5
  // Predicated region
  $region2: #{convolution_block.1} parent=0 // pred_check
    _
  $region3: #{convolution_block.1} parent=0 // pred_check_branch
    %10 = sbr.rel (0) target = $region5
  $region4: #{convolution_block.1} parent=0 // pred_region
    _
  $region5: #{convolution_block.1} parent=0 // pred_fallthru
    _
  // Predicated region
  $region6: #{convolution_block.1} parent=0 // pred_check
    _
  $region7: #{convolution_block.1} parent=0 // pred_check_branch
    %12 = sbr.rel (0) target = $region9
  $region8: #{convolution_block.1} parent=0 // pred_region
    _
  $region9: #{convolution_block.1} parent=0 // pred_fallthru
    _
  // Predicated region
  $region10: #{convolution_block.1} parent=0 // pred_check
    _
  $region11: #{convolution_block.1} parent=0 // pred_check_branch
    %14 = sbr.rel (0) target = $region13
  $region12: #{convolution_block.1} parent=0 // pred_region
    _
  $region13: #{convolution_block.1} parent=0 // pred_fallthru
    _
  // Predicated region
  $region14: #{convolution_block.1} parent=0 // pred_check
    _
  $region15: #{convolution_block.1} parent=0 // pred_check_branch
    %16 = sbr.rel (0) target = $region17
  $region16: #{convolution_block.1} parent=0 // pred_region
    _
  $region17: #{convolution_block.1} parent=0 // pred_fallthru
    _
  %v17 = vld [vmem:[%s1] sm:$0xff]
  %v18 = vld [vmem:[%s0] sm:$0xff]
  %v19 = vld [vmem:[%s0 + $0x8] sm:$0xff]
  %v20 = vld [vmem:[%s0 + $0x10] sm:$0xff]
  %v21 = vld [vmem:[%s0 + $0x18] sm:$0xff]
  %vm22 = vcmask 64512
  %v24 = vsel %vm22, %v17, 0
  %26 = vmatpush.msra.mxu0 0.0
  %27 = vmatpush.msra.mxu0 0.0
  %28 = vmatpush.msra.mxu0 0.0
  %29 = vmatpush.msra.mxu0 0.0
  %30 = vmatpush.msra.mxu0 0.0
  %31 = vmatpush.msra.mxu0 0.0
  %32 = vmatpush.msra.mxu0 0.0
  %33 = vmatpush.msra.mxu0 0.0
  %34 = vmatpush.msra.mxu0 0.0
  %35 = vmatpush.msra.mxu0 0.0
  %36 = vmatpush.msra.mxu0 0.0
  %37 = vmatpush.msra.mxu0 0.0
  %38 = vmatpush.msra.mxu0 0.0
  %39 = vmatpush.msra.mxu0 0.0
  %40 = vmatpush.msra.mxu0 0.0
  %41 = vmatpush.msra.mxu0 %v18
  %42 = vmatmul.f32.gmra.mxu0 %v24
  %v43 = vpop.f32.mrf.mxu0
  %v44 = vadd.f32 0.0, %v43
  %45 = vdwg.mxu0
  %46 = vmatpush.msra.mxu0 0.0
  %47 = vmatpush.msra.mxu0 0.0
  %48 = vmatpush.msra.mxu0 0.0
  %49 = vmatpush.msra.mxu0 0.0
  %50 = vmatpush.msra.mxu0 0.0
  %51 = vmatpush.msra.mxu0 0.0
  %52 = vmatpush.msra.mxu0 0.0
  %53 = vmatpush.msra.mxu0 0.0
  %54 = vmatpush.msra.mxu0 0.0
  %55 = vmatpush.msra.mxu0 0.0
  %56 = vmatpush.msra.mxu0 0.0
  %57 = vmatpush.msra.mxu0 0.0
  %58 = vmatpush.msra.mxu0 0.0
  %59 = vmatpush.msra.mxu0 0.0
  %60 = vmatpush.msra.mxu0 0.0
  %61 = vmatpush.msra.mxu0 %v19
  %62 = vmatmul.f32.gmra.mxu0 %v24
  %v63 = vpop.f32.mrf.mxu0
  %v64 = vadd.f32 0.0, %v63
  %65 = vdwg.mxu0
  %66 = vmatpush.msra.mxu0 0.0
  %67 = vmatpush.msra.mxu0 0.0
  %68 = vmatpush.msra.mxu0 0.0
  %69 = vmatpush.msra.mxu0 0.0
  %70 = vmatpush.msra.mxu0 0.0
  %71 = vmatpush.msra.mxu0 0.0
  %72 = vmatpush.msra.mxu0 0.0
  %73 = vmatpush.msra.mxu0 0.0
  %74 = vmatpush.msra.mxu0 0.0
  %75 = vmatpush.msra.mxu0 0.0
  %76 = vmatpush.msra.mxu0 0.0
  %77 = vmatpush.msra.mxu0 0.0
  %78 = vmatpush.msra.mxu0 0.0
  %79 = vmatpush.msra.mxu0 0.0
  %80 = vmatpush.msra.mxu0 0.0
  %81 = vmatpush.msra.mxu0 %v20
  %82 = vmatmul.f32.gmra.mxu0 %v24
  %v83 = vpop.f32.mrf.mxu0
  %v84 = vadd.f32 0.0, %v83
  %85 = vdwg.mxu0
  %86 = vmatpush.msra.mxu0 0.0
  %87 = vmatpush.msra.mxu0 0.0
  %88 = vmatpush.msra.mxu0 0.0
  %89 = vmatpush.msra.mxu0 0.0
  %90 = vmatpush.msra.mxu0 0.0
  %91 = vmatpush.msra.mxu0 0.0
  %92 = vmatpush.msra.mxu0 0.0
  %93 = vmatpush.msra.mxu0 0.0
  %94 = vmatpush.msra.mxu0 0.0
  %95 = vmatpush.msra.mxu0 0.0
  %96 = vmatpush.msra.mxu0 0.0
  %97 = vmatpush.msra.mxu0 0.0
  %98 = vmatpush.msra.mxu0 0.0
  %99 = vmatpush.msra.mxu0 0.0
  %100 = vmatpush.msra.mxu0 0.0
  %101 = vmatpush.msra.mxu0 %v21
  %102 = vmatmul.f32.gmra.mxu0 %v24
  %v103 = vpop.f32.mrf.mxu0
  %v104 = vadd.f32 0.0, %v103
  %105 = vdwg.mxu0
  %v106 = vld [vmem:[%s2] sm:$0xff]
  %v107 = vld [vmem:[%s3] sm:$0xff]
  %v108 = vld [vmem:[%s3 + $0x8] sm:$0xff]
  %109 = vrot.lane.b32.xlu0 %v44, 1
  %v110 = vpop.permute.xlu0 %109
  %111 = vrot.lane.b32.xlu0 %v64, 1
  %v112 = vpop.permute.xlu0 %111
  %113 = vrot.lane.b32.xlu0 %v84, 1
  %v114 = vpop.permute.xlu0 %113
  %115 = vrot.lane.b32.xlu0 %v104, 1
  %v116 = vpop.permute.xlu0 %115
  %v117 = vlaneseq
  %v118 = vand.u32 %v117, 127
  %vm119 = vcmp.lt.s32.totalorder %v118, 1
  %v120 = vsel %vm119, %v114, %v116
  %v121 = vsel %vm119, %v112, %v114
  %v122 = vsel %vm119, %v110, %v112
  %v123 = vsel %vm119, %v116, %v110
  %v126 = vperm.slane %v107, 0
  %v127 = vperm.slane %v107, 4
  %v128 = vperm.slane %v108, 0
  %v129 = vperm.slane %v108, 4
  %v134 = vperm.slane %v126, 0
  %v135 = vperm.slane %v127, 0
  %v136 = vperm.slane %v128, 0
  %v137 = vperm.slane %v129, 0
  %v138 = vmul.f32 %v123, %v134
  %v139 = vmul.f32 %v122, %v135
  %v140 = vmul.f32 %v121, %v136
  %v141 = vmul.f32 %v120, %v137
  %142 = vrot.lane.b32.xlu0 %v44, 127
  %v143 = vpop.permute.xlu0 %142
  %144 = vrot.lane.b32.xlu0 %v64, 127
  %v145 = vpop.permute.xlu0 %144
  %146 = vrot.lane.b32.xlu0 %v84, 127
  %v147 = vpop.permute.xlu0 %146
  %148 = vrot.lane.b32.xlu0 %v104, 127
  %v149 = vpop.permute.xlu0 %148
  %vm150 = vcmp.lt.s32.totalorder %v118, 127
  %v151 = vsel %vm150, %v147, %v149
  %v152 = vsel %vm150, %v145, %v147
  %v153 = vsel %vm150, %v143, %v145
  %v154 = vsel %vm150, %v149, %v143
  %v155 = vperm.slane %v107, 1
  %v156 = vperm.slane %v107, 5
  %v157 = vperm.slane %v108, 1
  %v158 = vperm.slane %v108, 5
  %v163 = vperm.slane %v155, 1
  %v164 = vperm.slane %v156, 1
  %v165 = vperm.slane %v157, 1
  %v166 = vperm.slane %v158, 1
  %v167 = vmul.f32 %v153, %v163
  %v168 = vmul.f32 %v152, %v164
  %v169 = vmul.f32 %v151, %v165
  %v170 = vmul.f32 %v154, %v166
  %172 = vset.pattern.permute.xlu0 0
  %173 = vperm.xlu0 %172, %v106
  %v174 = vpop.permute.xlu0 %173
  %v176 = vmul.f32 %v174, %v138
  %v177 = vmul.f32 %v174, %v139
  %v178 = vmul.f32 %v174, %v140
  %v179 = vmul.f32 %v174, %v141
  %180 = vset.pattern.permute.xlu0 1
  %181 = vperm.xlu0 %180, %v106
  %v182 = vpop.permute.xlu0 %181
  %v184 = vmul.f32 %v182, %v44
  %v185 = vmul.f32 %v182, %v64
  %v186 = vmul.f32 %v182, %v84
  %v187 = vmul.f32 %v182, %v104
  %v188 = vadd.f32 %v176, %v184
  %v189 = vadd.f32 %v177, %v185
  %v190 = vadd.f32 %v178, %v186
  %v191 = vadd.f32 %v179, %v187
  %192 = vset.pattern.permute.xlu0 2
  %193 = vperm.xlu0 %192, %v106
  %v194 = vpop.permute.xlu0 %193
  %v196 = vmul.f32 %v194, %v167
  %v197 = vmul.f32 %v194, %v168
  %v198 = vmul.f32 %v194, %v169
  %v199 = vmul.f32 %v194, %v170
  %v200 = vadd.f32 %v188, %v196
  %v201 = vadd.f32 %v189, %v197
  %v202 = vadd.f32 %v190, %v198
  %v203 = vadd.f32 %v191, %v199
  %204 = vset.pattern.permute.xlu0 3
  %205 = vperm.xlu0 %204, %v106
  %v206 = vpop.permute.xlu0 %205
  %v208 = vmul.f32 %v206, %v138
  %v209 = vmul.f32 %v206, %v139
  %v210 = vmul.f32 %v206, %v140
  %v211 = vmul.f32 %v206, %v141
  %212 = vset.pattern.permute.xlu0 4
  %213 = vperm.xlu0 %212, %v106
  %v214 = vpop.permute.xlu0 %213
  %v216 = vmul.f32 %v214, %v44
  %v217 = vmul.f32 %v214, %v64
  %v218 = vmul.f32 %v214, %v84
  %v219 = vmul.f32 %v214, %v104
  %v220 = vadd.f32 %v208, %v216
  %v221 = vadd.f32 %v209, %v217
  %v222 = vadd.f32 %v210, %v218
  %v223 = vadd.f32 %v211, %v219
  %224 = vset.pattern.permute.xlu0 5
  %225 = vperm.xlu0 %224, %v106
  %v226 = vpop.permute.xlu0 %225
  %v228 = vmul.f32 %v226, %v167
  %v229 = vmul.f32 %v226, %v168
  %v230 = vmul.f32 %v226, %v169
  %v231 = vmul.f32 %v226, %v170
  %v232 = vadd.f32 %v220, %v228
  %v233 = vadd.f32 %v221, %v229
  %v234 = vadd.f32 %v222, %v230
  %v235 = vadd.f32 %v223, %v231
  %236 = vset.pattern.permute.xlu0 6
  %237 = vperm.xlu0 %236, %v106
  %v238 = vpop.permute.xlu0 %237
  %v240 = vmul.f32 %v238, %v138
  %v241 = vmul.f32 %v238, %v139
  %v242 = vmul.f32 %v238, %v140
  %v243 = vmul.f32 %v238, %v141
  %244 = vset.pattern.permute.xlu0 7
  %245 = vperm.xlu0 %244, %v106
  %v246 = vpop.permute.xlu0 %245
  %v248 = vmul.f32 %v246, %v44
  %v249 = vmul.f32 %v246, %v64
  %v250 = vmul.f32 %v246, %v84
  %v251 = vmul.f32 %v246, %v104
  %v252 = vadd.f32 %v240, %v248
  %v253 = vadd.f32 %v241, %v249
  %v254 = vadd.f32 %v242, %v250
  %v255 = vadd.f32 %v243, %v251
  %256 = vset.pattern.permute.xlu0 8
  %257 = vperm.xlu0 %256, %v106
  %v258 = vpop.permute.xlu0 %257
  %v260 = vmul.f32 %v258, %v167
  %v261 = vmul.f32 %v258, %v168
  %v262 = vmul.f32 %v258, %v169
  %v263 = vmul.f32 %v258, %v170
  %v264 = vadd.f32 %v252, %v260
  %v265 = vadd.f32 %v253, %v261
  %v266 = vadd.f32 %v254, %v262
  %v267 = vadd.f32 %v255, %v263
  %268 = vrot.lane.b32.xlu0 %v200, 16
  %v269 = vpop.permute.xlu0 %268
  %270 = vrot.lane.b32.xlu0 %v201, 16
  %v271 = vpop.permute.xlu0 %270
  %272 = vrot.lane.b32.xlu0 %v202, 16
  %v273 = vpop.permute.xlu0 %272
  %274 = vrot.lane.b32.xlu0 %v203, 16
  %v275 = vpop.permute.xlu0 %274
  %vm276 = vcmp.lt.s32.totalorder %v118, 16
  %v277 = vsel %vm276, %v273, %v275
  %v278 = vsel %vm276, %v271, %v273
  %v279 = vsel %vm276, %v269, %v271
  %v280 = vsel %vm276, %v275, %v269
  %v281 = vperm.slane %v107, 2
  %v282 = vperm.slane %v107, 6
  %v283 = vperm.slane %v108, 2
  %v284 = vperm.slane %v108, 6
  %v289 = vperm.slane %v281, 2
  %v290 = vperm.slane %v282, 2
  %v291 = vperm.slane %v283, 2
  %v292 = vperm.slane %v284, 2
  %v293 = vmul.f32 %v280, %v289
  %v294 = vmul.f32 %v279, %v290
  %v295 = vmul.f32 %v278, %v291
  %v296 = vmul.f32 %v277, %v292
  %v297 = vadd.f32 %v293, %v232
  %v298 = vadd.f32 %v294, %v233
  %v299 = vadd.f32 %v295, %v234
  %v300 = vadd.f32 %v296, %v235
  %301 = vrot.lane.b32.xlu0 %v264, 112
  %v302 = vpop.permute.xlu0 %301
  %303 = vrot.lane.b32.xlu0 %v265, 112
  %v304 = vpop.permute.xlu0 %303
  %305 = vrot.lane.b32.xlu0 %v266, 112
  %v306 = vpop.permute.xlu0 %305
  %307 = vrot.lane.b32.xlu0 %v267, 112
  %v308 = vpop.permute.xlu0 %307
  %vm309 = vcmp.lt.s32.totalorder %v118, 112
  %v310 = vsel %vm309, %v306, %v308
  %v311 = vsel %vm309, %v304, %v306
  %v312 = vsel %vm309, %v302, %v304
  %v313 = vsel %vm309, %v308, %v302
  %v314 = vperm.slane %v107, 3
  %v315 = vperm.slane %v107, 7
  %v316 = vperm.slane %v108, 3
  %v317 = vperm.slane %v108, 7
  %v322 = vperm.slane %v314, 3
  %v323 = vperm.slane %v315, 3
  %v324 = vperm.slane %v316, 3
  %v325 = vperm.slane %v317, 3
  %v326 = vmul.f32 %v312, %v322
  %v327 = vmul.f32 %v311, %v323
  %v328 = vmul.f32 %v310, %v324
  %v329 = vmul.f32 %v313, %v325
  %v330 = vadd.f32 %v297, %v326
  %v331 = vadd.f32 %v298, %v327
  %v332 = vadd.f32 %v299, %v328
  %v333 = vadd.f32 %v300, %v329
  %334 = vst [vmem:[%s4] sm:$0xff] %v330
  %335 = vst [vmem:[%s4 + $0x8] sm:$0xff] %v331
  %336 = vst [vmem:[%s4 + $0x10] sm:$0xff] %v332
  %337 = vst [vmem:[%s4 + $0x18] sm:$0xff] %v333
  // Predicated region
  $region18: #{convolution_block.1} parent=0 // pred_check
    _
  $region19: #{convolution_block.1} parent=0 // pred_check_branch
    %339 = sbr.rel (0) target = $region21
  $region20: #{convolution_block.1} parent=0 // pred_region
    _
  $region21: #{convolution_block.1} parent=0 // pred_fallthru
    _
  // Predicated region
  $region22: #{convolution_block.1} parent=0 // pred_check
    _
  $region23: #{convolution_block.1} parent=0 // pred_check_branch
    %341 = sbr.rel (0) target = $region25
  $region24: #{convolution_block.1} parent=0 // pred_region
    _
  $region25: #{convolution_block.1} parent=0 // pred_fallthru
    _

</llo_original>
